<compile_context>
chip_gen: v6e
topology: v6e:2x2x1
jax: 0.10.0
libtpu: 0.0.40
codegen_flags: <defaults>
</compile_context>

<pallas_src>
import functools

import jax
import jax.numpy as jnp
from jax.experimental import pallas as pl
from jax.experimental.pallas import tpu as pltpu

_LANE = 128


# ---------------------------------------------------------------------------
# VMEM budgeting (accounts for every resident / double-buffered block)
# ---------------------------------------------------------------------------
def _vmem_capacity():
    try:
        cap = int(pltpu.get_tpu_info().vmem_capacity_bytes)
        if cap < (16 << 20) or cap > (1 << 30):
            raise ValueError
        return cap
    except Exception:
        return 64 << 20            # conservative fallback (v7x per-TC physical)


def _vmem_limit_bytes(cap):
    # ~48 MiB on v7x (64 MiB physical), ~96 MiB on v5e/v6e (128 MiB physical)
    return int(max(16 << 20, min(int(cap * 0.75), cap - (8 << 20))))


def _enc_bytes(tile_b, tile_h, D, w_isz, post_isz):
    return (2 * tile_b * D * w_isz            # x_cent block (double-buffered)
            + 2 * D * tile_h * w_isz          # W_enc^T tile
            + 2 * 8 * tile_h * 4              # b_enc tile (sublane-padded)
            + 2 * tile_b * tile_h * post_isz)  # post_enc output block


def _dec_bytes(tile_b, tile_h, D, w_isz, post_isz, emit_acts):
    b = (2 * tile_b * D * 4                   # x block (f32)
         + 2 * tile_b * tile_h * post_isz     # post_enc block
         + 2 * tile_h * D * w_isz             # W_dec^T tile
         + 2 * 8 * D * 4                      # b_dec
         + 2 * tile_b * _LANE * 4             # l2 output block
         + tile_b * D * 4)                    # f32 accumulator scratch
    if emit_acts:
        b += 2 * tile_b * tile_h * post_isz   # acts output block
    return b


def _tile_candidates(n, step, cap):
    """Divisors of n that are multiples of step, descending, capped at `cap`."""
    out = []
    c = min(n, cap)
    c -= c % step
    while c >= step:
        if n % c == 0:
            out.append(c)
        c -= step
    return out or [n]


def _choose_tiles(B_pad, H, D, sub, w_isz, post_isz, emit_acts, budget,
                  tile_b=None, tile_h=None):
    """Largest (tile_b, tile_h) whose total pipelined VMEM footprint fits.

    tile_b is preferred large first (keeps n_b small -> limits W_dec
    re-streaming in the decoder), then tile_h as large as the budget allows
    (main lever for HBM-roofline DMA sizes)."""
    tb_cands = [tile_b] if tile_b else _tile_candidates(B_pad, sub, 512)
    th_cands = [tile_h] if tile_h else _tile_candidates(H, 128, 4096)
    for tb in tb_cands:
        for th in th_cands:
            need = max(_enc_bytes(tb, th, D, w_isz, post_isz),
                       _dec_bytes(tb, th, D, w_isz, post_isz, emit_acts))
            if need <= budget:
                return tb, th
    return tb_cands[-1], th_cands[-1]


# ---------------------------------------------------------------------------
# Kernel 1: encoder  post_enc = x_cent @ W_enc^T + b_enc   (grid = (n_h, n_b))
# ---------------------------------------------------------------------------
def _encoder_kernel(xc_ref, w_enc_t_ref, b_enc_ref, post_ref, *,
                    tile_b, valid_rows, mask_rows):
    post = (jnp.dot(xc_ref[...], w_enc_t_ref[...],
                    preferred_element_type=jnp.float32)
            + b_enc_ref[...])                               # (1,tile_h) bcast
    if mask_rows:
        # pad-row masking fused here (free VPU filler in a mem-bound kernel)
        row0 = pl.program_id(1) * tile_b
        rows = row0 + jax.lax.broadcasted_iota(jnp.int32, post.shape, 0)
        post = jnp.where(rows < valid_rows, post, -jnp.inf)
    post_ref[...] = post.astype(post_ref.dtype)


# ---------------------------------------------------------------------------
# Kernel 2: batch-topk mask, decoder matmul (H reduction), per-sample L2
#           grid = (n_b "parallel", n_h "arbitrary")
# ---------------------------------------------------------------------------
def _decoder_kernel(thresh_ref, x_ref, post_ref, w_dec_t_ref, b_dec_ref,
                    *refs, emit_acts, compute_dtype):
    if emit_acts:
        acts_ref, l2_ref, acc_ref = refs
    else:
        l2_ref, acc_ref = refs

    h = pl.program_id(1)

    @pl.when(h == 0)
    def _():
        acc_ref[...] = jnp.zeros_like(acc_ref)

    relu_thresh = thresh_ref[0, 0]                         # f32 scalar (SMEM)
    post = post_ref[...]                                   # (tile_b, tile_h)
    # scatter_(relu(topk.values)) == keep entries >= global k-th value, relu'd
    # which (with relu_thresh = max(thresh, 0)) is a single select:
    acts = jnp.where(post >= relu_thresh, post, jnp.zeros_like(post))
    if emit_acts:
        acts_ref[...] = acts

    acc_ref[...] += jnp.dot(acts.astype(compute_dtype), w_dec_t_ref[...],
                            preferred_element_type=jnp.float32)

    @pl.when(h == pl.num_programs(1) - 1)
    def _():
        xrec = acc_ref[...] + b_dec_ref[...]               # (tile_b, D) f32
        diff = xrec - x_ref[...]
        l2 = jnp.sum(diff * diff, axis=-1, keepdims=True)  # (tile_b, 1)
        l2_ref[...] = jnp.broadcast_to(l2, l2_ref.shape)   # lane-dense store


# ---------------------------------------------------------------------------
# Glue: exact global batch-top-k threshold (per-row candidates -> global topk)
# ---------------------------------------------------------------------------
def _global_topk_threshold(post_enc, batch_k):
    # TODO(synk): sort-class op, no clean Pallas lowering; runs in plain JAX.
    _, H = post_enc.shape
    pe = post_enc.astype(jnp.float32)
    per_row = min(batch_k, H)
    if per_row < H:
        cand, _ = jax.lax.top_k(pe, per_row)               # (B_pad, per_row)
        vals, _ = jax.lax.top_k(cand.reshape(-1), batch_k)
    else:
        vals, _ = jax.lax.top_k(pe.reshape(-1), batch_k)
    return vals[batch_k - 1]


# ---------------------------------------------------------------------------
# Parameter construction (mirrors the PyTorch __init__ shapes; pre-transposed)
# ---------------------------------------------------------------------------
def init_params(key, input_dim, d_hidden, dtype=jnp.float32):
    k_enc, k_dec = jax.random.split(key)
    enc_bound = (6.0 / input_dim) ** 0.5          # kaiming_uniform_, fan_in
    w_enc = jax.random.uniform(k_enc, (d_hidden, input_dim), dtype,
                               minval=-enc_bound, maxval=enc_bound)
    dec_bound = (6.0 / d_hidden) ** 0.5
    w_dec = jax.random.uniform(k_dec, (input_dim, d_hidden), dtype,
                               minval=-dec_bound, maxval=dec_bound)
    w_dec = w_dec / jnp.linalg.norm(w_dec, axis=-1, keepdims=True)
    return dict(
        w_enc_t=w_enc.T,                          # (D, H)  pre-transposed once
        w_dec_t=w_dec.T,                          # (H, D)  pre-transposed once
        b_enc=jnp.zeros((d_hidden,), dtype),
        b_dec=jnp.zeros((input_dim,), dtype),
    )


def prepare_params(params, compute_dtype):
    """Pre-cast streaming weights once. bf16 everywhere; fp8 (e4m3) is the
    right 8-bit choice on v7x, int8 (with scales, TODO) on v5e/v6e."""
    p = dict(params)
    p["w_enc_t_c"] = params["w_enc_t"].astype(compute_dtype)
    p["w_dec_t_c"] = params["w_dec_t"].astype(compute_dtype)
    return p


# ---------------------------------------------------------------------------
# Forward wrapper
# ---------------------------------------------------------------------------
def batch_topk_autoencoder_forward(params, x, k, *,
                                   return_acts=False,
                                   return_l2_error_per_sample=False,
                                   compute_dtype=jnp.bfloat16,
                                   post_dtype=None,
                                   tile_h=None, tile_b=None,
                                   weight_buffers=None):
    x = x.astype(jnp.float32)
    B_orig, D = x.shape
    H = params["w_enc_t"].shape[1]
    batch_k = min(int(k) * B_orig, B_orig * H)
    assert batch_k >= 1

    compute_dtype = jnp.dtype(compute_dtype)
    if post_dtype is None:
        post_dtype = (jnp.dtype(jnp.float32) if compute_dtype == jnp.float32
                      else jnp.dtype(jnp.bfloat16))
    post_dtype = jnp.dtype(post_dtype)
    w_isz = compute_dtype.itemsize
    p_isz = post_dtype.itemsize

    cap = _vmem_capacity()
    vmem_limit = _vmem_limit_bytes(cap)

    # --- pad B to the sublane-packing multiple ------------------------------
    sub = max(8, 32 // w_isz)                     # 8 for f32, 16 for bf16
    B_pad = -(-B_orig // sub) * sub

    tile_b, tile_h = _choose_tiles(B_pad, H, D, sub, w_isz, p_isz,
                                   return_acts, int(vmem_limit * 0.9),
                                   tile_b=tile_b, tile_h=tile_h)
    assert H % tile_h == 0 and B_pad % tile_b == 0
    n_h, n_b = H // tile_h, B_pad // tile_b

    # --- weights / biases in streaming + f32 forms --------------------------
    w_enc_t_c = params.get("w_enc_t_c")
    if w_enc_t_c is None or w_enc_t_c.dtype != compute_dtype:
        w_enc_t_c = params["w_enc_t"].astype(compute_dtype)
    w_dec_t_c = params.get("w_dec_t_c")
    if w_dec_t_c is None or w_dec_t_c.dtype != compute_dtype:
        w_dec_t_c = params["w_dec_t"].astype(compute_dtype)
    b_enc2 = params["b_enc"].astype(jnp.float32).reshape(1, H)
    b_dec2 = params["b_dec"].astype(jnp.float32).reshape(1, D)

    x_p = jnp.pad(x, ((0, B_pad - B_orig), (0, 0))) if B_pad != B_orig else x
    # centering done once (not per H-tile inside the kernel)
    x_cent_c = (x_p - b_dec2).astype(compute_dtype)

    # --- kernel 1: encoder, grid = (n_h, n_b), weights stream exactly once --
    if weight_buffers:
        enc_w_spec = pl.BlockSpec((D, tile_h), lambda h, b: (0, h),
                                  pipeline_mode=pl.Buffered(weight_buffers))
    else:
        enc_w_spec = pl.BlockSpec((D, tile_h), lambda h, b: (0, h))

    post_enc = pl.pallas_call(
        functools.partial(_encoder_kernel, tile_b=tile_b, valid_rows=B_orig,
                          mask_rows=(B_pad != B_orig)),
        grid=(n_h, n_b),
        in_specs=[
            pl.BlockSpec((tile_b, D), lambda h, b: (b, 0)),     # x_cent
            enc_w_spec,                                         # W_enc^T tile
            pl.BlockSpec((1, tile_h), lambda h, b: (0, h)),     # b_enc tile
        ],
        out_specs=pl.BlockSpec((tile_b, tile_h), lambda h, b: (b, h)),
        out_shape=jax.ShapeDtypeStruct((B_pad, H), post_dtype),
        compiler_params=pltpu.CompilerParams(
            dimension_semantics=("parallel", "parallel"),
            vmem_limit_bytes=vmem_limit),
    )(x_cent_c, w_enc_t_c, b_enc2)

    # --- glue: global batch-top-k threshold; hoist relu(thresh) -------------
    thresh = _global_topk_threshold(post_enc, batch_k)
    relu_thresh = jnp.maximum(thresh, 0.0).astype(jnp.float32).reshape(1, 1)

    # --- kernel 2: mask + decoder (B parallel, H reduction) + per-sample L2 -
    if weight_buffers:
        dec_w_spec = pl.BlockSpec((tile_h, D), lambda b, h: (h, 0),
                                  pipeline_mode=pl.Buffered(weight_buffers))
    else:
        dec_w_spec = pl.BlockSpec((tile_h, D), lambda b, h: (h, 0))

    out_shapes = [jax.ShapeDtypeStruct((B_pad, _LANE), jnp.float32)]    # l2
    out_specs = [pl.BlockSpec((tile_b, _LANE), lambda b, h: (b, 0))]
    if return_acts:
        out_shapes = [jax.ShapeDtypeStruct((B_pad, H), post_dtype)] + out_shapes
        out_specs = [pl.BlockSpec((tile_b, tile_h), lambda b, h: (b, h))] + out_specs

    outs = pl.pallas_call(
        functools.partial(_decoder_kernel, emit_acts=return_acts,
                          compute_dtype=compute_dtype),
        grid=(n_b, n_h),
        in_specs=[
            pl.BlockSpec(memory_space=pltpu.MemorySpace.SMEM),     # relu_thresh
            pl.BlockSpec((tile_b, D), lambda b, h: (b, 0)),        # x (f32)
            pl.BlockSpec((tile_b, tile_h), lambda b, h: (b, h)),   # post tile
            dec_w_spec,                                            # W_dec^T
            pl.BlockSpec((1, D), lambda b, h: (0, 0)),             # b_dec
        ],
        out_specs=tuple(out_specs),
        out_shape=tuple(out_shapes),
        scratch_shapes=[pltpu.VMEM((tile_b, D), jnp.float32)],     # x_rec acc
        compiler_params=pltpu.CompilerParams(
            dimension_semantics=("parallel", "arbitrary"),
            vmem_limit_bytes=vmem_limit),
    )(relu_thresh, x_p, post_enc, w_dec_t_c, b_dec2)

    if return_acts:
        acts_pad, l2_pad = outs
    else:
        acts_pad, l2_pad = None, outs[0]

    l2_per_sample = l2_pad[:B_orig, :1]                    # (B, 1)
    loss = jnp.mean(l2_per_sample, axis=0)                 # (1,)
    penalty = jnp.zeros((), jnp.float32)                   # dec_penalty None

    acts_out = acts_pad[:B_orig] if return_acts else None
    l2_out = l2_per_sample if return_l2_error_per_sample else None
    return loss, acts_out, penalty, l2_out


# ---------------------------------------------------------------------------
# Pure-JAX reference + tolerant acts comparison (threshold-boundary flips)
# ---------------------------------------------------------------------------
def _reference_forward(params, x, k, compute_dtype=jnp.float32):
    B = x.shape[0]
    batch_k = k * B
    w_enc_t = params["w_enc_t"].astype(jnp.float32)
    w_dec_t = params["w_dec_t"].astype(jnp.float32)
    b_enc = params["b_enc"].astype(jnp.float32)
    b_dec = params["b_dec"].astype(jnp.float32)

    x = x.astype(jnp.float32)
    x_cent = x - b_dec
    post_enc = jnp.dot(x_cent.astype(compute_dtype), w_enc_t.astype(compute_dtype),
                       preferred_element_type=jnp.float32) + b_enc
    flat = post_enc.reshape(-1)
    vals, idxs = jax.lax.top_k(flat, batch_k)
    acts = jnp.zeros_like(flat).at[idxs].set(jnp.maximum(vals, 0.0))
    acts = acts.reshape(post_enc.shape)
    x_rec = jnp.dot(acts.astype(compute_dtype), w_dec_t.astype(compute_dtype),
                    preferred_element_type=jnp.float32) + b_dec
    l2 = jnp.sum((x_rec - x) ** 2, axis=-1, keepdims=True)
    return jnp.mean(l2, axis=0), acts, l2


def _acts_close(a, b, rtol=1e-2, atol=1e-2, max_flips=8):
    a = jnp.asarray(a, jnp.float32)
    b = jnp.asarray(b, jnp.float32)
    nz_a, nz_b = a != 0, b != 0
    flips = int(jnp.sum(nz_a != nz_b))             # threshold-boundary flips
    both = jnp.logical_and(nz_a, nz_b)
    val_ok = bool(jnp.all(jnp.where(both,
                                    jnp.abs(a - b) <= atol + rtol * jnp.abs(b),
                                    True)))
    return flips <= max_flips and val_ok


if __name__ == "__main__":
    INPUT_DIM, D_HIDDEN, TOPK = 256, 1024, 4

    key = jax.random.PRNGKey(0)
    k_param, k_x1, k_x2 = jax.random.split(key, 3)
    params = init_params(k_param, INPUT_DIM, D_HIDDEN)

    # ---- Test 1: f32, forced 4-step H reduction, single B tile -------------
    x1 = jax.random.normal(k_x1, (8, INPUT_DIM), jnp.float32)
    loss, acts, penalty, l2 = batch_topk_autoencoder_forward(
        params, x1, TOPK, return_acts=True, return_l2_error_per_sample=True,
        compute_dtype=jnp.float32, tile_h=256)
    jax.block_until_ready((loss, acts, penalty, l2))
    ref_loss, ref_acts, ref_l2 = _reference_forward(params, x1, TOPK)
    assert loss.shape == (1,) and acts.shape == (8, D_HIDDEN) and l2.shape == (8, 1)
    assert jnp.allclose(loss, ref_loss, rtol=1e-2, atol=1e-2)
    assert jnp.allclose(l2, ref_l2, rtol=5e-2, atol=5e-2)
    assert _acts_close(acts, ref_acts)

    # ---- Test 2: f32, B=10 (pads to 16), B-tiled (tile_b=8) + H-tiled ------
    x2 = jax.random.normal(k_x2, (10, INPUT_DIM), jnp.float32)
    loss2, acts2, _, l22 = batch_topk_autoencoder_forward(
        params, x2, TOPK, return_acts=True, return_l2_error_per_sample=True,
        compute_dtype=jnp.float32, tile_h=256, tile_b=8)
    jax.block_until_ready((loss2, acts2, l22))
    ref_loss2, ref_acts2, ref_l22 = _reference_forward(params, x2, TOPK)
    assert loss2.shape == (1,) and acts2.shape == (10, D_HIDDEN) and l22.shape == (10, 1)
    assert jnp.allclose(loss2, ref_loss2, rtol=1e-2, atol=1e-2)
    assert jnp.allclose(l22, ref_l22, rtol=5e-2, atol=5e-2)
    assert _acts_close(acts2, ref_acts2)

    # ---- Test 3: bf16 weight streaming + bf16 post_enc (auto tiles) --------
    params_bf16 = prepare_params(params, jnp.bfloat16)
    loss_bf, acts_bf, _, l2_bf = batch_topk_autoencoder_forward(
        params_bf16, x1, TOPK, return_acts=True,
        return_l2_error_per_sample=True, compute_dtype=jnp.bfloat16)
    jax.block_until_ready((loss_bf, acts_bf, l2_bf))
    ref_loss_bf, _, _ = _reference_forward(params, x1, TOPK,
                                           compute_dtype=jnp.bfloat16)
    assert loss_bf.shape == (1,) and acts_bf.shape == (8, D_HIDDEN)
    assert l2_bf.shape == (8, 1)
    assert jnp.allclose(loss_bf, ref_loss_bf, rtol=5e-2, atol=2e-1)

    print("KERNEL_OK")
</pallas_src>

<mosaic_0001>
module attributes {stable_mosaic.version = 11 : i64} {
  func.func @_encoder_kernel(%arg0: i32, %arg1: i32, %arg2: memref<8x256xf32, #tpu.memory_space<vmem>>, %arg3: memref<256x256xf32, #tpu.memory_space<vmem>>, %arg4: memref<1x256xf32, #tpu.memory_space<vmem>>, %arg5: memref<8x256xf32, #tpu.memory_space<vmem>>) attributes {dimension_semantics = [#tpu.dimension_semantics<parallel>, #tpu.dimension_semantics<parallel>], iteration_bounds = array<i64: 4, 1>, scalar_prefetch = 0 : i64, scratch_operands = 0 : i64, tpu.core_type = #tpu.core_type<tc>, window_params = [{transform_indices = @transform_0, window_bounds = array<i64: 8, 256>}, {transform_indices = @transform_1, window_bounds = array<i64: 256, 256>}, {transform_indices = @transform_2, window_bounds = array<i64: 1, 256>}, {transform_indices = @transform_3, window_bounds = array<i64: 8, 256>}]} {
    %c0 = arith.constant 0 : index
    %c0_0 = arith.constant 0 : index
    %0 = vector.load %arg2[%c0, %c0_0] : memref<8x256xf32, #tpu.memory_space<vmem>>, vector<8x256xf32>
    %c0_1 = arith.constant 0 : index
    %c0_2 = arith.constant 0 : index
    %1 = vector.load %arg3[%c0_1, %c0_2] : memref<256x256xf32, #tpu.memory_space<vmem>>, vector<256x256xf32>
    %cst = arith.constant dense<0.000000e+00> : vector<8x256xf32>
    %2 = tpu.matmul %0, %1, %cst {dimension_numbers = #tpu.dot_dimension_numbers<[1], [0], [0], [1], [0, 0, 1, 1], [], []>} : vector<8x256xf32>, vector<256x256xf32>, vector<8x256xf32> -> vector<8x256xf32>
    %c0_3 = arith.constant 0 : index
    %c0_4 = arith.constant 0 : index
    %3 = vector.load %arg4[%c0_3, %c0_4] : memref<1x256xf32, #tpu.memory_space<vmem>>, vector<1x256xf32>
    %4 = vector.broadcast %3 : vector<1x256xf32> to vector<8x256xf32>
    %5 = arith.addf %2, %4 : vector<8x256xf32>
    %c0_5 = arith.constant 0 : index
    %c0_6 = arith.constant 0 : index
    %6 = vector.load %arg5[%c0_5, %c0_6] : memref<8x256xf32, #tpu.memory_space<vmem>>, vector<8x256xf32>
    tpu.vector_store %arg5[%c0_5, %c0_6], %5 {strides = array<i32>} : memref<8x256xf32, #tpu.memory_space<vmem>>, vector<8x256xf32>,
    return
  }
  func.func @transform_0(%arg0: i32, %arg1: i32) -> (i32, i32) {
    %c0_i32 = arith.constant 0 : i32
    %c0_i32_0 = arith.constant 0 : i32
    return %arg1, %c0_i32 : i32, i32
  }
  func.func @transform_1(%arg0: i32, %arg1: i32) -> (i32, i32) {
    %c0_i32 = arith.constant 0 : i32
    %c0_i32_0 = arith.constant 0 : i32
    return %c0_i32, %arg0 : i32, i32
  }
  func.func @transform_2(%arg0: i32, %arg1: i32) -> (i32, i32) {
    %c0_i32 = arith.constant 0 : i32
    %c0_i32_0 = arith.constant 0 : i32
    return %c0_i32, %arg0 : i32, i32
  }
  func.func @transform_3(%arg0: i32, %arg1: i32) -> (i32, i32) {
    %c0_i32 = arith.constant 0 : i32
    return %arg1, %arg0 : i32, i32
  }
}

</mosaic_0001>

<llo_original>
// kernel: tpu_custom_call.1
$region0: #{tpu_custom_call.1}
  #allocation0 [shape = 'u32[]', space=smem, size = 0x4, offset = 0x4, fixed_abs, tag = 'smem constant byte address 0x4 - core index']
  #allocation1 [shape = 'u32[144,128]{1,0:T(1,128)}', space=vmem, size = 0x12000, scoped, tag = 'internal scratch']
  %s0 = inlined_call_operand.hbm [shape: f32[8,256], index: 0, kind: input, shape index: {}]
  %s1 = inlined_call_operand.hbm [shape: f32[256,1024], index: 1, kind: input, shape index: {}]
  %s2 = inlined_call_operand.hbm [shape: f32[1,1024], index: 2, kind: input, shape index: {}]
  %s3 = inlined_call_operand.hbm [shape: f32[8,1024], index: 3, kind: output, shape index: {}]
  %s4 = sld [smem:[#allocation0]]
  $region57: #{tpu_custom_call.1} parent=0
    _
  %s6 = ssub.s32 1, %s4
  %s7 = scalar_select 0, %s6, %s4
  $region1: #{tpu_custom_call.1} parent=0
    #allocation2 [shape = 'u8[8192]{0}', space=vmem, size = 0x2000, scoped, tag = 'input window, operand 0, single buffered']
    #allocation3 [shape = 's32[2]{0}', space=sflag, size = 0x8, scoped, tag = 'scoped memory for tpu_custom_call.1']
    #allocation4 [shape = 's32[2]{0}', space=sflag, size = 0x8, scoped, tag = 'scoped memory for tpu_custom_call.1']
    #allocation5 [shape = 'u8[524288]{0}', space=vmem, size = 0x80000, scoped, tag = 'input window, operand 1']
    #allocation6 [shape = 's32[2]{0}', space=sflag, size = 0x8, scoped, tag = 'scoped memory for tpu_custom_call.1']
    #allocation7 [shape = 'u8[2048]{0}', space=vmem, size = 0x800, scoped, tag = 'input window, operand 2']
    #allocation8 [shape = 'u8[16384]{0}', space=vmem, size = 0x4000, scoped, tag = 'output window, operand 0']
    %8 = vsyncpa [#allocation3], 0
    %9 = vsyncpa [#allocation6], 0
    %s10 = scalar_lea.sflag [#allocation6], 1
    %11 = vsyncpa %s10, 0
    %12 = vsyncpa [#allocation4], 0
    %s13 = scalar_lea.sflag [#allocation4], 1
    %14 = vsyncpa %s13, 0
    loop: start=0, step=1, limit=6
    $region2: #{tpu_custom_call.1} parent=1 // loop_pre_header
      _
    $region3: #{tpu_custom_call.1} parent=1 // loop_header
      %s16 = sphi 0, %s20
      %p17 = scmp.ge.s32.totalorder %s16, 6
      %s23 = sphi 0, %s35
      %s24 = sphi 0, %s31
      %s25 = sphi 0, %s23
      %s26 = sphi 0, %s24
      %s27 = sphi 0, %s25
      %s28 = sphi 0, %s26
      %s38 = sphi 0, %s40
      %s41 = sphi 0, %s38
      %s42 = sphi 0, %s41
      %s58 = sphi 0, %s42
      %s64 = sphi 0, %s66
      %s67 = sphi 0, %s64
      %s68 = sphi 0, %s67
      %s84 = sphi 0, %s68
      %s90 = sphi 0, %s92
      %s93 = sphi 0, %s90
      %s94 = sphi 0, %s93
      %s110 = sphi 0, %s94
      %s118 = sphi 0, %s120
      %s121 = sphi 0, %s118
      %s122 = sphi 0, %s121
      %s138 = sphi 0, %s122
    $region4: #{tpu_custom_call.1} parent=1 // loop_header_branch
      %19 = sbr.rel (%p17) target = $region8
    $region5: #{tpu_custom_call.1} parent=1 // loop_body
      %s21 = ssub.s32 %s16, 1
      %s22 = ssub.s32 %s16, 2
      %s29 = sadd.s32 1, %s24
      %p30 = scmp.ge.s32.totalorder %s29, 1
      %s31 = scalar_select %p30, 0, %s29
      %s32 = sadd.s32 1, %s23
      %s33 = scalar_select %p30, %s32, %s23
      %p34 = scmp.ge.s32.totalorder %s33, 4
      %s35 = scalar_select %p34, 0, %s33
      %s36 = ssub.s32 %s24, %s31
      %p37 = scmp.eq.s32.totalorder %s36, 0
      %s39 = sadd.s32 %s38, 1
      %s40 = scalar_select %p37, %s38, %s39
      %p43 = pneg %p37
      %p44 = scmp.eq.s32.totalorder %s16, 3
      %p45 = por %p43, %p44
      %p46 = scmp.ne.s32.totalorder %s38, %s41
      %p47 = scmp.eq.s32.totalorder %s16, 0
      %p48 = por %p46, %p47
      %p49 = scmp.ne.s32.totalorder %s38, %s41
      %p50 = scmp.eq.s32.totalorder %s21, 3
      %p51 = por %p49, %p50
      %p52 = scmp.ne.s32.totalorder %s41, %s42
      %p53 = scmp.eq.s32.totalorder %s21, 0
      %p54 = por %p52, %p53
      %p55 = scmp.ne.s32.totalorder %s41, %s42
      %p56 = scmp.eq.s32.totalorder %s22, 3
      %p57 = por %p55, %p56
      %p59 = scmp.ne.s32.totalorder %s42, %s58
      %p60 = scmp.eq.s32.totalorder %s22, 0
      %p61 = por %p59, %p60
      %s62 = ssub.s32 %s23, %s35
      %p63 = scmp.eq.s32.totalorder %s62, 0
      %s65 = sadd.s32 %s64, 1
      %s66 = scalar_select %p63, %s64, %s65
      %p69 = pneg %p63
      %p70 = scmp.eq.s32.totalorder %s16, 3
      %p71 = por %p69, %p70
      %p72 = scmp.ne.s32.totalorder %s64, %s67
      %p73 = scmp.eq.s32.totalorder %s16, 0
      %p74 = por %p72, %p73
      %p75 = scmp.ne.s32.totalorder %s64, %s67
      %p76 = scmp.eq.s32.totalorder %s21, 3
      %p77 = por %p75, %p76
      %p78 = scmp.ne.s32.totalorder %s67, %s68
      %p79 = scmp.eq.s32.totalorder %s21, 0
      %p80 = por %p78, %p79
      %p81 = scmp.ne.s32.totalorder %s67, %s68
      %p82 = scmp.eq.s32.totalorder %s22, 3
      %p83 = por %p81, %p82
      %p85 = scmp.ne.s32.totalorder %s68, %s84
      %p86 = scmp.eq.s32.totalorder %s22, 0
      %p87 = por %p85, %p86
      %s88 = ssub.s32 %s23, %s35
      %p89 = scmp.eq.s32.totalorder %s88, 0
      %s91 = sadd.s32 %s90, 1
      %s92 = scalar_select %p89, %s90, %s91
      %p95 = pneg %p89
      %p96 = scmp.eq.s32.totalorder %s16, 3
      %p97 = por %p95, %p96
      %p98 = scmp.ne.s32.totalorder %s90, %s93
      %p99 = scmp.eq.s32.totalorder %s16, 0
      %p100 = por %p98, %p99
      %p101 = scmp.ne.s32.totalorder %s90, %s93
      %p102 = scmp.eq.s32.totalorder %s21, 3
      %p103 = por %p101, %p102
      %p104 = scmp.ne.s32.totalorder %s93, %s94
      %p105 = scmp.eq.s32.totalorder %s21, 0
      %p106 = por %p104, %p105
      %p107 = scmp.ne.s32.totalorder %s93, %s94
      %p108 = scmp.eq.s32.totalorder %s22, 3
      %p109 = por %p107, %p108
      %p111 = scmp.ne.s32.totalorder %s94, %s110
      %p112 = scmp.eq.s32.totalorder %s22, 0
      %p113 = por %p111, %p112
      %s114 = ssub.s32 %s24, %s31
      %s115 = ssub.s32 %s23, %s35
      %s116 = sor.u32 %s114, %s115
      %p117 = scmp.eq.s32.totalorder %s116, 0
      %s119 = sadd.s32 %s118, 1
      %s120 = scalar_select %p117, %s118, %s119
      %p123 = pneg %p117
      %p124 = scmp.eq.s32.totalorder %s16, 3
      %p125 = por %p123, %p124
      %p126 = scmp.ne.s32.totalorder %s118, %s121
      %p127 = scmp.eq.s32.totalorder %s16, 0
      %p128 = por %p126, %p127
      %p129 = scmp.ne.s32.totalorder %s118, %s121
      %p130 = scmp.eq.s32.totalorder %s21, 3
      %p131 = por %p129, %p130
      %p132 = scmp.ne.s32.totalorder %s121, %s122
      %p133 = scmp.eq.s32.totalorder %s21, 0
      %p134 = por %p132, %p133
      %p135 = scmp.ne.s32.totalorder %s121, %s122
      %p136 = scmp.eq.s32.totalorder %s22, 3
      %p137 = por %p135, %p136
      %p139 = scmp.ne.s32.totalorder %s122, %s138
      %p140 = scmp.eq.s32.totalorder %s22, 0
      %p141 = por %p139, %p140
      %p142 = scmp.le.s32.totalorder 1, %s16
      %p143 = scmp.lt.s32.totalorder %s16, 5
      %p144 = pnand %p142, %p143
      %p145 = pneg %p144
      // Predicated region
      $region9: #{tpu_custom_call.1} parent=5 // pred_check
        _
      $region10: #{tpu_custom_call.1} parent=5 // pred_check_branch
        %147 = sbr.rel (%p144) target = $region12
      $region11: #{tpu_custom_call.1} parent=5 // pred_region
        %s148 = ssub.s32 %s16, 1
        // Predicated region
        $region13: #{tpu_custom_call.1} parent=11 // pred_check
          %p149 = pneg %p54
        $region14: #{tpu_custom_call.1} parent=11 // pred_check_branch
          %151 = sbr.rel (%p149) target = $region16
        $region15: #{tpu_custom_call.1} parent=11 // pred_region
          %s153 = ssub.s32 256, 256
          %154 = vsyncadd [#allocation3], %s153
          %s155 = smul.addr %s26, 2
          %s156 = smul.addr %s155, 128
          %s157 = scalar_lea.hbm %s0, %s156
          %s159 = sshll.u32 [#allocation2], 4
          %s160 = int_to_ptr.vmem [resolvable:$true] %s159
          %162 = dma.hbm_to_vmem [thread:$0]  %s157, 256, %s160, [#allocation3]
        $region16: #{tpu_custom_call.1} parent=11 // pred_fallthru
          _
      $region12: #{tpu_custom_call.1} parent=5 // pred_fallthru
        _
      %p163 = scmp.lt.s32.totalorder %s16, 4
      // Predicated region
      $region17: #{tpu_custom_call.1} parent=5 // pred_check
        %p164 = pneg %p163
      $region18: #{tpu_custom_call.1} parent=5 // pred_check_branch
        %166 = sbr.rel (%p164) target = $region20
      $region19: #{tpu_custom_call.1} parent=5 // pred_region
        // Predicated region
        $region21: #{tpu_custom_call.1} parent=19 // pred_check
          %p167 = pneg %p74
        $region22: #{tpu_custom_call.1} parent=19 // pred_check_branch
          %169 = sbr.rel (%p167) target = $region24
        $region23: #{tpu_custom_call.1} parent=19 // pred_region
          %s170 = sand.u32 %s16, 1
          %s171 = scalar_lea.sflag [#allocation6], %s170
          %s172 = sand.u32 %s64, 1
          %s173 = smul.addr %s172, 512
          %s174 = scalar_lea.vmem [#allocation5], %s173
          %s175 = smul.u32 2, %s23
          %s177 = ssub.s32 8192, 8192
          %178 = vsyncadd %s171, %s177
          %s179 = smul.addr %s175, 128
          %s180 = scalar_lea.hbm %s1, %s179
          %s181 = sshll.u32 %s174, 4
          %s182 = int_to_ptr.vmem [resolvable:$true] %s181
          %187 = dma.hbm_to_vmem [thread:$0]  %s180, 8192, %s182, %s171, 1024, 256, 16
        $region24: #{tpu_custom_call.1} parent=19 // pred_fallthru
          _
        // Predicated region
        $region25: #{tpu_custom_call.1} parent=19 // pred_check
          %p188 = pneg %p100
        $region26: #{tpu_custom_call.1} parent=19 // pred_check_branch
          %190 = sbr.rel (%p188) target = $region28
        $region27: #{tpu_custom_call.1} parent=19 // pred_region
          %s191 = sand.u32 %s16, 1
          %s192 = scalar_lea.sflag [#allocation6], %s191
          %s193 = sand.u32 %s90, 1
          %s194 = smul.addr %s193, 2
          %s195 = scalar_lea.vmem [#allocation7], %s194
          %s196 = smul.u32 2, %s23
          %s198 = ssub.s32 32, 32
          %199 = vsyncadd %s192, %s198
          %s200 = smul.addr %s196, 16
          %s201 = scalar_lea.hbm %s2, %s200
          %s203 = sshll.u32 %s195, 4
          %s204 = int_to_ptr.vmem [resolvable:$true] %s203
          %206 = dma.hbm_to_vmem [thread:$0]  %s201, 32, %s204, %s192
        $region28: #{tpu_custom_call.1} parent=19 // pred_fallthru
          _
      $region20: #{tpu_custom_call.1} parent=5 // pred_fallthru
        _
      %p207 = scmp.le.s32.totalorder 1, %s16
      %p208 = scmp.lt.s32.totalorder %s16, 5
      %p209 = pnand %p207, %p208
      %p210 = pneg %p209
      // Predicated region
      $region29: #{tpu_custom_call.1} parent=5 // pred_check
        _
      $region30: #{tpu_custom_call.1} parent=5 // pred_check_branch
        %212 = sbr.rel (%p209) target = $region32
      $region31: #{tpu_custom_call.1} parent=5 // pred_region
        %s213 = ssub.s32 %s16, 1
        // Predicated region
        $region33: #{tpu_custom_call.1} parent=31 // pred_check
          %p214 = pneg %p54
        $region34: #{tpu_custom_call.1} parent=31 // pred_check_branch
          %216 = sbr.rel (%p214) target = $region36
        $region35: #{tpu_custom_call.1} parent=31 // pred_region
          %217 = dma.done [#allocation3], 256
        $region36: #{tpu_custom_call.1} parent=31 // pred_fallthru
          _
        %s218 = sand.u32 %s21, 1
        %s219 = scalar_lea.sflag [#allocation6], %s218
        %s220 = sand.u32 %s67, 1
        %s221 = smul.addr %s220, 512
        %s222 = scalar_lea.vmem [#allocation5], %s221
        // Predicated region
        $region37: #{tpu_custom_call.1} parent=31 // pred_check
          %p223 = pneg %p80
        $region38: #{tpu_custom_call.1} parent=31 // pred_check_branch
          %225 = sbr.rel (%p223) target = $region40
        $region39: #{tpu_custom_call.1} parent=31 // pred_region
          %226 = dma.done %s219, 8192
        $region40: #{tpu_custom_call.1} parent=31 // pred_fallthru
          _
        %s227 = sand.u32 %s21, 1
        %s228 = scalar_lea.sflag [#allocation6], %s227
        %s229 = sand.u32 %s93, 1
        %s230 = smul.addr %s229, 2
        %s231 = scalar_lea.vmem [#allocation7], %s230
        // Predicated region
        $region41: #{tpu_custom_call.1} parent=31 // pred_check
          %p232 = pneg %p106
        $region42: #{tpu_custom_call.1} parent=31 // pred_check_branch
          %234 = sbr.rel (%p232) target = $region44
        $region43: #{tpu_custom_call.1} parent=31 // pred_region
          %235 = dma.done %s228, 32
        $region44: #{tpu_custom_call.1} parent=31 // pred_fallthru
          _
        %p236 = pneg %p54
        %p237 = pneg %p51
        %s238 = sand.u32 %s21, 1
        %s239 = scalar_lea.sflag [#allocation6], %s238
        %s240 = sand.u32 %s67, 1
        %s241 = smul.addr %s240, 512
        %s242 = scalar_lea.vmem [#allocation5], %s241
        %p243 = pneg %p80
        %p244 = pneg %p77
        %s245 = sand.u32 %s21, 1
        %s246 = scalar_lea.sflag [#allocation6], %s245
        %s247 = sand.u32 %s93, 1
        %s248 = smul.addr %s247, 2
        %s249 = scalar_lea.vmem [#allocation7], %s248
        %p250 = pneg %p106
        %p251 = pneg %p103
        %p252 = pneg %p134
        %p253 = pneg %p131
        %s254 = sand.u32 %s121, 1
        %s255 = scalar_lea.sflag [#allocation4], %s254
        %s256 = sand.u32 %s121, 1
        %s257 = smul.addr %s256, 16
        %s258 = scalar_lea.vmem [#allocation8], %s257
        %s259 = smul.u32 2, %s25
        %s260 = smul.u32 2, %s25
        %s261 = smul.u32 2, %s25
        %v262 = vld [vmem:[#allocation2] sm:$0xff]
        %v263 = vld [vmem:[#allocation2 + $0x8] sm:$0xff]
        %v264 = vld [vmem:[%s222] sm:$0xff]
        %v265 = vld [vmem:[%s222 + $0x8] sm:$0xff]
        %v266 = vld [vmem:[%s222 + $0x10] sm:$0xff]
        %v267 = vld [vmem:[%s222 + $0x18] sm:$0xff]
        %v268 = vld [vmem:[%s222 + $0x20] sm:$0xff]
        %v269 = vld [vmem:[%s222 + $0x28] sm:$0xff]
        %v270 = vld [vmem:[%s222 + $0x30] sm:$0xff]
        %v271 = vld [vmem:[%s222 + $0x38] sm:$0xff]
        %v272 = vld [vmem:[%s222 + $0x40] sm:$0xff]
        %v273 = vld [vmem:[%s222 + $0x48] sm:$0xff]
        %v274 = vld [vmem:[%s222 + $0x50] sm:$0xff]
        %v275 = vld [vmem:[%s222 + $0x58] sm:$0xff]
        %v276 = vld [vmem:[%s222 + $0x60] sm:$0xff]
        %v277 = vld [vmem:[%s222 + $0x68] sm:$0xff]
        %v278 = vld [vmem:[%s222 + $0x70] sm:$0xff]
        %v279 = vld [vmem:[%s222 + $0x78] sm:$0xff]
        %v280 = vld [vmem:[%s222 + $0x80] sm:$0xff]
        %v281 = vld [vmem:[%s222 + $0x88] sm:$0xff]
        %v282 = vld [vmem:[%s222 + $0x90] sm:$0xff]
        %v283 = vld [vmem:[%s222 + $0x98] sm:$0xff]
        %v284 = vld [vmem:[%s222 + $0xa0] sm:$0xff]
        %v285 = vld [vmem:[%s222 + $0xa8] sm:$0xff]
        %v286 = vld [vmem:[%s222 + $0xb0] sm:$0xff]
        %v287 = vld [vmem:[%s222 + $0xb8] sm:$0xff]
        %v288 = vld [vmem:[%s222 + $0xc0] sm:$0xff]
        %v289 = vld [vmem:[%s222 + $0xc8] sm:$0xff]
        %v290 = vld [vmem:[%s222 + $0xd0] sm:$0xff]
        %v291 = vld [vmem:[%s222 + $0xd8] sm:$0xff]
        %v292 = vld [vmem:[%s222 + $0xe0] sm:$0xff]
        %v293 = vld [vmem:[%s222 + $0xe8] sm:$0xff]
        %v294 = vld [vmem:[%s222 + $0xf0] sm:$0xff]
        %v295 = vld [vmem:[%s222 + $0xf8] sm:$0xff]
        %v296 = vld [vmem:[%s222 + $0x100] sm:$0xff]
        %v297 = vld [vmem:[%s222 + $0x108] sm:$0xff]
        %v298 = vld [vmem:[%s222 + $0x110] sm:$0xff]
        %v299 = vld [vmem:[%s222 + $0x118] sm:$0xff]
        %v300 = vld [vmem:[%s222 + $0x120] sm:$0xff]
        %v301 = vld [vmem:[%s222 + $0x128] sm:$0xff]
        %v302 = vld [vmem:[%s222 + $0x130] sm:$0xff]
        %v303 = vld [vmem:[%s222 + $0x138] sm:$0xff]
        %v304 = vld [vmem:[%s222 + $0x140] sm:$0xff]
        %v305 = vld [vmem:[%s222 + $0x148] sm:$0xff]
        %v306 = vld [vmem:[%s222 + $0x150] sm:$0xff]
        %v307 = vld [vmem:[%s222 + $0x158] sm:$0xff]
        %v308 = vld [vmem:[%s222 + $0x160] sm:$0xff]
        %v309 = vld [vmem:[%s222 + $0x168] sm:$0xff]
        %v310 = vld [vmem:[%s222 + $0x170] sm:$0xff]
        %v311 = vld [vmem:[%s222 + $0x178] sm:$0xff]
        %v312 = vld [vmem:[%s222 + $0x180] sm:$0xff]
        %v313 = vld [vmem:[%s222 + $0x188] sm:$0xff]
        %v314 = vld [vmem:[%s222 + $0x190] sm:$0xff]
        %v315 = vld [vmem:[%s222 + $0x198] sm:$0xff]
        %v316 = vld [vmem:[%s222 + $0x1a0] sm:$0xff]
        %v317 = vld [vmem:[%s222 + $0x1a8] sm:$0xff]
        %v318 = vld [vmem:[%s222 + $0x1b0] sm:$0xff]
        %v319 = vld [vmem:[%s222 + $0x1b8] sm:$0xff]
        %v320 = vld [vmem:[%s222 + $0x1c0] sm:$0xff]
        %v321 = vld [vmem:[%s222 + $0x1c8] sm:$0xff]
        %v322 = vld [vmem:[%s222 + $0x1d0] sm:$0xff]
        %v323 = vld [vmem:[%s222 + $0x1d8] sm:$0xff]
        %v324 = vld [vmem:[%s222 + $0x1e0] sm:$0xff]
        %v325 = vld [vmem:[%s222 + $0x1e8] sm:$0xff]
        %v326 = vld [vmem:[%s222 + $0x1f0] sm:$0xff]
        %v327 = vld [vmem:[%s222 + $0x1f8] sm:$0xff]
        %v328 = vld [vmem:[%s231] sm:$0x3]
        %v330 = vlaneseq
        %v331 = vshrl.u32 %v330, 7
        %v332 = vsub.s32 0, %v331
        %v333 = vrot.slane %v328, %v332
        %v334 = vlaneseq
        %v335 = vshrl.u32 %v334, 7
        %v336 = vsub.s32 1, %v335
        %v337 = vrot.slane %v328, %v336
        %340 = vmatprep.subr.mxu0 %v295
        %341 = vmatpush1.msra.mxu0 %v294
        %342 = vmatprep.subr.mxu0 %v293
        %343 = vmatpush1.msra.mxu0 %v292
        %344 = vmatprep.subr.mxu0 %v291
        %345 = vmatpush1.msra.mxu0 %v290
        %346 = vmatprep.subr.mxu0 %v289
        %347 = vmatpush1.msra.mxu0 %v288
        %348 = vmatprep.subr.mxu0 %v287
        %349 = vmatpush1.msra.mxu0 %v286
        %350 = vmatprep.subr.mxu0 %v285
        %351 = vmatpush1.msra.mxu0 %v284
        %352 = vmatprep.subr.mxu0 %v283
        %353 = vmatpush1.msra.mxu0 %v282
        %354 = vmatprep.subr.mxu0 %v281
        %355 = vmatpush1.msra.mxu0 %v280
        %356 = vmatprep.subr.mxu0 %v279
        %357 = vmatpush1.msra.mxu0 %v278
        %358 = vmatprep.subr.mxu0 %v277
        %359 = vmatpush1.msra.mxu0 %v276
        %360 = vmatprep.subr.mxu0 %v275
        %361 = vmatpush1.msra.mxu0 %v274
        %362 = vmatprep.subr.mxu0 %v273
        %363 = vmatpush1.msra.mxu0 %v272
        %364 = vmatprep.subr.mxu0 %v271
        %365 = vmatpush1.msra.mxu0 %v270
        %366 = vmatprep.subr.mxu0 %v269
        %367 = vmatpush1.msra.mxu0 %v268
        %368 = vmatprep.subr.mxu0 %v267
        %369 = vmatpush1.msra.mxu0 %v266
        %370 = vmatprep.subr.mxu0 %v265
        %371 = vmatpush1.msra.mxu0 %v264
        %372 = vmatprep.subr.mxu0 %v327
        %373 = vmatpush2.msra.mxu0 %v326
        %374 = vmatprep.subr.mxu0 %v325
        %375 = vmatpush2.msra.mxu0 %v324
        %376 = vmatprep.subr.mxu0 %v323
        %377 = vmatpush2.msra.mxu0 %v322
        %378 = vmatprep.subr.mxu0 %v321
        %379 = vmatpush2.msra.mxu0 %v320
        %380 = vmatprep.subr.mxu0 %v319
        %381 = vmatpush2.msra.mxu0 %v318
        %382 = vmatprep.subr.mxu0 %v317
        %383 = vmatpush2.msra.mxu0 %v316
        %384 = vmatprep.subr.mxu0 %v315
        %385 = vmatpush2.msra.mxu0 %v314
        %386 = vmatprep.subr.mxu0 %v313
        %387 = vmatpush2.msra.mxu0 %v312
        %388 = vmatprep.subr.mxu0 %v311
        %389 = vmatpush2.msra.mxu0 %v310
        %390 = vmatprep.subr.mxu0 %v309
        %391 = vmatpush2.msra.mxu0 %v308
        %392 = vmatprep.subr.mxu0 %v307
        %393 = vmatpush2.msra.mxu0 %v306
        %394 = vmatprep.subr.mxu0 %v305
        %395 = vmatpush2.msra.mxu0 %v304
        %396 = vmatprep.subr.mxu0 %v303
        %397 = vmatpush2.msra.mxu0 %v302
        %398 = vmatprep.subr.mxu0 %v301
        %399 = vmatpush2.msra.mxu0 %v300
        %400 = vmatprep.subr.mxu0 %v299
        %401 = vmatpush2.msra.mxu0 %v298
        %402 = vmatprep.subr.mxu0 %v297
        %403 = vmatpush2.msra.mxu0 %v296
        %404 = vmatprep.mubr.f32.mxu0 %v263
        %405 = vmatmul.mubr.f32.gmra.mxu0 %v262
        %v406 = vpop.f32.mrf.mxu0
        %v407 = vadd.f32 %v333, %v406
        %v408 = vpop.f32.mrf.mxu0
        %v409 = vadd.f32 %v337, %v408
        %410 = vdwg.mxu0
        %411 = vst [vmem:[%s258] sm:$0xff] %v407
        %412 = vst [vmem:[%s258 + $0x8] sm:$0xff] %v409
        %s413 = sand.u32 %s121, 1
        %s414 = scalar_lea.sflag [#allocation4], %s413
        %s415 = sand.u32 %s121, 1
        %s416 = smul.addr %s415, 16
        %s417 = scalar_lea.vmem [#allocation8], %s416
        // Predicated region
        $region45: #{tpu_custom_call.1} parent=31 // pred_check
          %p418 = pneg %p131
        $region46: #{tpu_custom_call.1} parent=31 // pred_check_branch
          %420 = sbr.rel (%p418) target = $region48
        $region47: #{tpu_custom_call.1} parent=31 // pred_region
          %s421 = smul.u32 2, %s25
          %s423 = ssub.s32 256, 256
          %424 = vsyncadd %s414, %s423
          %s425 = smul.addr %s26, 8
          %s426 = sadd.s32 %s421, %s425
          %s427 = smul.addr %s426, 128
          %s428 = scalar_lea.hbm %s3, %s427
          %s430 = sshll.u32 %s417, 4
          %s431 = int_to_ptr.vmem [resolvable:$true] %s430
          %433 = dma.vmem_to_hbm [thread:$0]  %s431, 256, %s428, %s414
        $region48: #{tpu_custom_call.1} parent=31 // pred_fallthru
          _
      $region32: #{tpu_custom_call.1} parent=5 // pred_fallthru
        _
      %p434 = scmp.le.s32.totalorder 2, %s16
      // Predicated region
      $region49: #{tpu_custom_call.1} parent=5 // pred_check
        %p435 = pneg %p434
      $region50: #{tpu_custom_call.1} parent=5 // pred_check_branch
        %437 = sbr.rel (%p435) target = $region52
      $region51: #{tpu_custom_call.1} parent=5 // pred_region
        %s438 = ssub.s32 %s16, 2
        // Predicated region
        $region53: #{tpu_custom_call.1} parent=51 // pred_check
          %p439 = pneg %p137
        $region54: #{tpu_custom_call.1} parent=51 // pred_check_branch
          %441 = sbr.rel (%p439) target = $region56
        $region55: #{tpu_custom_call.1} parent=51 // pred_region
          %s442 = sand.u32 %s122, 1
          %s443 = scalar_lea.sflag [#allocation4], %s442
          %s444 = sand.u32 %s122, 1
          %s445 = smul.addr %s444, 16
          %s446 = scalar_lea.vmem [#allocation8], %s445
          %447 = dma.done %s443, 256
        $region56: #{tpu_custom_call.1} parent=51 // pred_fallthru
          _
      $region52: #{tpu_custom_call.1} parent=5 // pred_fallthru
        _
    $region6: #{tpu_custom_call.1} parent=1 // loop_footer
      %s20 = sadd.s32 1, %s16
    $region7: #{tpu_custom_call.1} parent=1 // loop_footer_branch
      %15 = sbr.rel target = $region3
    $region8: #{tpu_custom_call.1} parent=1 // loop_exit
      _
    %448 = vsyncpa [#allocation3], 1
    %s449 = scalar_lea.sflag [#allocation3], 1
    %450 = vsyncpa %s449, 1
    %451 = vsyncpa [#allocation6], 1
    %s452 = scalar_lea.sflag [#allocation6], 1
    %453 = vsyncpa %s452, 1
    %454 = vsyncpa [#allocation4], 1
    %s455 = scalar_lea.sflag [#allocation4], 1
    %456 = vsyncpa %s455, 1

</llo_original>
